<compile_context>
chip_gen: v5e
topology: v5e:2x2
jax: 0.10.0
libtpu: 0.0.40
codegen_flags: <defaults>
</compile_context>

<pallas_src>
import functools

import numpy as np
import jax
import jax.numpy as jnp
from jax.experimental import pallas as pl
from jax.experimental.pallas import tpu as pltpu


def _round_up(x, m):
    return (x + m - 1) // m * m


def actor_critic_kernel(x_ref,
                        w1_ref, b1_ref,        # feature_extractor[0]
                        w2_ref, b2_ref,        # feature_extractor[2]
                        wh_ref, bh_ref,        # fused [actor_mean | value slot | critic[0]] heads
                        wc2_ref, bc2_ref,      # critic[2] as a (1, H_pad) row
                        out_ref,               # (TB, out_lanes) = [mean | value | pad]
                        *, action_dim, out_lanes):
    # Matmul operand dtype (f32 or bf16); accumulation is always f32.
    mm_dt = w1_ref.dtype

    x = x_ref[...]

    # feature_extractor: Linear -> Tanh -> Linear -> Tanh (tanh always in f32)
    h1 = jnp.tanh(
        jnp.dot(x, w1_ref[...], preferred_element_type=jnp.float32) + b1_ref[...])
    feat = jnp.tanh(
        jnp.dot(h1.astype(mm_dt), w2_ref[...],
                preferred_element_type=jnp.float32) + b2_ref[...])

    # Fused heads: one matmul computes the actor mean (cols [0:A]) and the
    # critic hidden pre-activation (cols [out_lanes : out_lanes+H]); remaining
    # cols are zero padding so both regions are lane-tile aligned.
    head = (jnp.dot(feat.astype(mm_dt), wh_ref[...],
                    preferred_element_type=jnp.float32) + bh_ref[...])

    # critic[1:] : Tanh then (hidden -> 1) as a VPU multiply + lane reduction
    # instead of an N=1 MXU matmul. Padded lanes are tanh(0)*0 == 0.
    c1 = jnp.tanh(head[:, out_lanes:])
    value = jnp.sum(c1 * wc2_ref[...], axis=-1, keepdims=True) + bc2_ref[...]

    # HBM output is only the lane-dense 128-wide [mean | value | pad] slab;
    # the critic-hidden columns never leave VMEM. One full-width store plus a
    # single narrow-column splice for the scalar value (no iota/where pass).
    out_ref[...] = head[:, :out_lanes]
    out_ref[:, pl.ds(action_dim, 1)] = value


def _choose_tiling(batch, sublane, tb_max=2048):
    """Balanced batch tiles, capped at tb_max rows; force >=2 grid steps for
    batches big enough that v7x's two TensorCores should both work."""
    n_tiles = pl.cdiv(batch, tb_max)
    if n_tiles == 1 and batch >= 512:
        n_tiles = 2   # lets the "parallel" grid axis shard across 2 TCs on v7x
    tb = _round_up(pl.cdiv(batch, n_tiles), sublane)
    padded = _round_up(batch, tb)
    return tb, padded, padded // tb


def actor_critic_forward(state, params):
    """Returns (action_mean, action_logstd, value) — same semantics as
    ActorCritic.forward in the PyTorch module."""
    batch, state_dim = state.shape
    hidden_dim = params["w1"].shape[1]
    action_dim = params["logstd"].shape[0]

    h_pad = _round_up(hidden_dim, 128)
    head_w = params["w_heads"].shape[1]
    out_lanes = head_w - h_pad              # 128-wide [mean | value | pad] slab

    mm_dt = params["w1_mm"].dtype           # f32 (small models) or bf16
    sublane = 16 if mm_dt == jnp.bfloat16 else 8

    tb, padded, nb = _choose_tiling(batch, sublane)
    state_in = state.astype(mm_dt)
    if padded != batch:
        state_in = jnp.pad(state_in, ((0, padded - batch), (0, 0)))

    kernel = functools.partial(
        actor_critic_kernel, action_dim=action_dim, out_lanes=out_lanes)

    def resident(arr):   # full-array VMEM block, same tile every grid step
        return pl.BlockSpec(arr.shape, lambda i: (0, 0))

    elem = jnp.dtype(mm_dt).itemsize
    weight_bytes = (elem * (params["w1_mm"].size + params["w2_mm"].size
                            + params["w_heads_mm"].size)
                    + 4 * (params["b1"].size + params["b2"].size
                           + params["b_heads"].size + params["wc2_row"].size
                           + params["bc2"].size))
    cost = pl.CostEstimate(
        flops=2 * padded * (state_dim * hidden_dim
                            + hidden_dim * hidden_dim
                            + hidden_dim * head_w),
        transcendentals=padded * (2 * hidden_dim + h_pad),
        bytes_accessed=elem * padded * state_dim
                       + 4 * padded * out_lanes + weight_bytes,
    )

    slab = pl.pallas_call(
        kernel,
        out_shape=jax.ShapeDtypeStruct((padded, out_lanes), jnp.float32),
        grid=(nb,),
        in_specs=[
            pl.BlockSpec((tb, state_dim), lambda i: (i, 0)),
            resident(params["w1_mm"]), resident(params["b1"]),
            resident(params["w2_mm"]), resident(params["b2"]),
            resident(params["w_heads_mm"]), resident(params["b_heads"]),
            resident(params["wc2_row"]), resident(params["bc2"]),
        ],
        out_specs=pl.BlockSpec((tb, out_lanes), lambda i: (i, 0)),
        compiler_params=pltpu.CompilerParams(
            dimension_semantics=("parallel",)),
        cost_estimate=cost,
    )(
        state_in,
        params["w1_mm"], params["b1"],
        params["w2_mm"], params["b2"],
        params["w_heads_mm"], params["b_heads"],
        params["wc2_row"], params["bc2"],
    )

    mean = slab[:batch, :action_dim]
    value = slab[:batch, action_dim:action_dim + 1]
    # action_logstd is a bare nn.Parameter returned as-is (no compute in forward).
    return mean, params["logstd"], value


def init_params(key, state_dim, action_dim, hidden_dim):
    """Deterministic init mirroring the module: orthogonal(gain=sqrt(2)) weights,
    zero biases, zero logstd. Weights stored (in, out). The actor head, the
    value slot, and the first critic layer are packed into one fused,
    lane-aligned weight `w_heads` (built here, NOT in the kernel). Matmul
    operands additionally get a pre-cast copy (bf16 once hidden_dim >= 128,
    per the perf review; f32 otherwise)."""
    ortho = jax.nn.initializers.orthogonal(scale=float(np.sqrt(2.0)))
    k1, k2, k3, k4, k5 = jax.random.split(key, 5)
    f32 = jnp.float32

    w1 = ortho(k1, (state_dim, hidden_dim), f32)
    w2 = ortho(k2, (hidden_dim, hidden_dim), f32)
    wam = ortho(k3, (hidden_dim, action_dim), f32)
    wc1 = ortho(k4, (hidden_dim, hidden_dim), f32)
    wc2 = ortho(k5, (hidden_dim, 1), f32)

    b1 = jnp.zeros((1, hidden_dim), f32)
    b2 = jnp.zeros((1, hidden_dim), f32)
    bam = jnp.zeros((1, action_dim), f32)
    bc1 = jnp.zeros((1, hidden_dim), f32)
    bc2 = jnp.zeros((1, 1), f32)

    # Fused head layout (all regions lane-tile aligned):
    #   cols [0:A)                       -> actor_mean weight (wam)
    #   col  [A]                         -> slot for the scalar value (zero)
    #   cols [A+1 : out_lanes)           -> zero padding
    #   cols [out_lanes : out_lanes+H)   -> critic[0] weight (wc1)
    #   cols [out_lanes+H : out_lanes+H_pad) -> zero padding
    out_lanes = _round_up(action_dim + 1, 128)
    h_pad = _round_up(hidden_dim, 128)
    w_heads = jnp.zeros((hidden_dim, out_lanes + h_pad), f32)
    w_heads = w_heads.at[:, :action_dim].set(wam)
    w_heads = w_heads.at[:, out_lanes:out_lanes + hidden_dim].set(wc1)
    b_heads = jnp.zeros((1, out_lanes + h_pad), f32)
    b_heads = b_heads.at[:, :action_dim].set(bam)
    b_heads = b_heads.at[:, out_lanes:out_lanes + hidden_dim].set(bc1)

    # critic[2] weight as a zero-padded (1, H_pad) row for the VPU lane-reduce.
    wc2_row = jnp.zeros((1, h_pad), f32).at[:, :hidden_dim].set(wc2.T)

    # Matmul-operand copies: bf16 on MXU pays off once the model is non-tiny;
    # tanh / biases / the value reduce always stay f32 (v5e has no bf16 VPU/EUP).
    mm_dt = jnp.bfloat16 if hidden_dim >= 128 else f32

    return {
        # raw (kept for reference / checkpoint parity)
        "w1": w1, "b1": b1, "w2": w2, "b2": b2,
        "wam": wam, "bam": bam, "wc1": wc1, "bc1": bc1, "wc2": wc2,
        # kernel-facing fused / pre-cast params
        "w1_mm": w1.astype(mm_dt),
        "w2_mm": w2.astype(mm_dt),
        "w_heads": w_heads,
        "w_heads_mm": w_heads.astype(mm_dt),
        "b_heads": b_heads,
        "wc2_row": wc2_row,
        "bc2": bc2,
        "logstd": jnp.zeros((action_dim,), f32),
    }


if __name__ == "__main__":
    state_dim, action_dim, hidden_dim, batch = 16, 4, 32, 8

    key = jax.random.PRNGKey(0)
    k_param, k_state = jax.random.split(key)

    params = init_params(k_param, state_dim, action_dim, hidden_dim)
    state = jax.random.normal(k_state, (batch, state_dim), dtype=jnp.float32)

    action_mean, action_logstd, value = jax.jit(actor_critic_forward)(state, params)
    jax.block_until_ready((action_mean, action_logstd, value))

    # Reference check in plain JAX (same math, no Pallas, unfused weights).
    h = jnp.tanh(state @ params["w1"] + params["b1"])
    feat = jnp.tanh(h @ params["w2"] + params["b2"])
    ref_mean = feat @ params["wam"] + params["bam"]
    ref_val = jnp.tanh(feat @ params["wc1"] + params["bc1"]) @ params["wc2"] + params["bc2"]

    assert action_mean.shape == (batch, action_dim)
    assert action_logstd.shape == (action_dim,)
    assert value.shape == (batch, 1)
    assert jnp.allclose(action_mean, ref_mean, atol=2e-5)
    assert jnp.allclose(value, ref_val, atol=2e-5)
    assert jnp.all(action_logstd == 0.0)

    print("KERNEL_OK")
</pallas_src>

<mosaic_0001>
module attributes {stable_mosaic.version = 11 : i64} {
  func.func @actor_critic_kernel(%arg0: i32, %arg1: memref<8x16xf32, #tpu.memory_space<vmem>>, %arg2: memref<16x32xf32, #tpu.memory_space<vmem>>, %arg3: memref<1x32xf32, #tpu.memory_space<vmem>>, %arg4: memref<32x32xf32, #tpu.memory_space<vmem>>, %arg5: memref<1x32xf32, #tpu.memory_space<vmem>>, %arg6: memref<32x256xf32, #tpu.memory_space<vmem>>, %arg7: memref<1x256xf32, #tpu.memory_space<vmem>>, %arg8: memref<1x128xf32, #tpu.memory_space<vmem>>, %arg9: memref<1x1xf32, #tpu.memory_space<vmem>>, %arg10: memref<8x128xf32, #tpu.memory_space<vmem>>) attributes {dimension_semantics = [#tpu.dimension_semantics<parallel>], iteration_bounds = array<i64: 1>, scalar_prefetch = 0 : i64, scratch_operands = 0 : i64, tpu.core_type = #tpu.core_type<tc>, window_params = [{transform_indices = @transform_0, window_bounds = array<i64: 8, 16>}, {pipeline_mode = #tpu.pipeline_mode<synchronous>, transform_indices = @transform_1, window_bounds = array<i64: 16, 32>}, {pipeline_mode = #tpu.pipeline_mode<synchronous>, transform_indices = @transform_2, window_bounds = array<i64: 1, 32>}, {pipeline_mode = #tpu.pipeline_mode<synchronous>, transform_indices = @transform_3, window_bounds = array<i64: 32, 32>}, {pipeline_mode = #tpu.pipeline_mode<synchronous>, transform_indices = @transform_4, window_bounds = array<i64: 1, 32>}, {pipeline_mode = #tpu.pipeline_mode<synchronous>, transform_indices = @transform_5, window_bounds = array<i64: 32, 256>}, {pipeline_mode = #tpu.pipeline_mode<synchronous>, transform_indices = @transform_6, window_bounds = array<i64: 1, 256>}, {pipeline_mode = #tpu.pipeline_mode<synchronous>, transform_indices = @transform_7, window_bounds = array<i64: 1, 128>}, {pipeline_mode = #tpu.pipeline_mode<synchronous>, transform_indices = @transform_8, window_bounds = array<i64: 1, 1>}, {transform_indices = @transform_9, window_bounds = array<i64: 8, 128>}]} {
    %c0 = arith.constant 0 : index
    %c0_0 = arith.constant 0 : index
    %0 = vector.load %arg1[%c0, %c0_0] : memref<8x16xf32, #tpu.memory_space<vmem>>, vector<8x16xf32>
    %c0_1 = arith.constant 0 : index
    %c0_2 = arith.constant 0 : index
    %1 = vector.load %arg2[%c0_1, %c0_2] : memref<16x32xf32, #tpu.memory_space<vmem>>, vector<16x32xf32>
    %cst = arith.constant dense<0.000000e+00> : vector<8x32xf32>
    %2 = tpu.matmul %0, %1, %cst {dimension_numbers = #tpu.dot_dimension_numbers<[1], [0], [0], [1], [0, 0, 1, 1], [], []>} : vector<8x16xf32>, vector<16x32xf32>, vector<8x32xf32> -> vector<8x32xf32>
    %c0_3 = arith.constant 0 : index
    %c0_4 = arith.constant 0 : index
    %3 = vector.load %arg3[%c0_3, %c0_4] : memref<1x32xf32, #tpu.memory_space<vmem>>, vector<1x32xf32>
    %4 = vector.broadcast %3 : vector<1x32xf32> to vector<8x32xf32>
    %5 = arith.addf %2, %4 : vector<8x32xf32>
    %6 = math.tanh %5 : vector<8x32xf32>
    %c0_5 = arith.constant 0 : index
    %c0_6 = arith.constant 0 : index
    %7 = vector.load %arg4[%c0_5, %c0_6] : memref<32x32xf32, #tpu.memory_space<vmem>>, vector<32x32xf32>
    %cst_7 = arith.constant dense<0.000000e+00> : vector<8x32xf32>
    %8 = tpu.matmul %6, %7, %cst_7 {dimension_numbers = #tpu.dot_dimension_numbers<[1], [0], [0], [1], [0, 0, 1, 1], [], []>} : vector<8x32xf32>, vector<32x32xf32>, vector<8x32xf32> -> vector<8x32xf32>
    %c0_8 = arith.constant 0 : index
    %c0_9 = arith.constant 0 : index
    %9 = vector.load %arg5[%c0_8, %c0_9] : memref<1x32xf32, #tpu.memory_space<vmem>>, vector<1x32xf32>
    %10 = vector.broadcast %9 : vector<1x32xf32> to vector<8x32xf32>
    %11 = arith.addf %8, %10 : vector<8x32xf32>
    %12 = math.tanh %11 : vector<8x32xf32>
    %c0_10 = arith.constant 0 : index
    %c0_11 = arith.constant 0 : index
    %13 = vector.load %arg6[%c0_10, %c0_11] : memref<32x256xf32, #tpu.memory_space<vmem>>, vector<32x256xf32>
    %cst_12 = arith.constant dense<0.000000e+00> : vector<8x256xf32>
    %14 = tpu.matmul %12, %13, %cst_12 {dimension_numbers = #tpu.dot_dimension_numbers<[1], [0], [0], [1], [0, 0, 1, 1], [], []>} : vector<8x32xf32>, vector<32x256xf32>, vector<8x256xf32> -> vector<8x256xf32>
    %c0_13 = arith.constant 0 : index
    %c0_14 = arith.constant 0 : index
    %15 = vector.load %arg7[%c0_13, %c0_14] : memref<1x256xf32, #tpu.memory_space<vmem>>, vector<1x256xf32>
    %16 = vector.broadcast %15 : vector<1x256xf32> to vector<8x256xf32>
    %17 = arith.addf %14, %16 : vector<8x256xf32>
    %18 = vector.extract_strided_slice %17 {offsets = [0, 128], sizes = [8, 128], strides = [1, 1]} : vector<8x256xf32> to vector<8x128xf32>
    %19 = math.tanh %18 : vector<8x128xf32>
    %c0_15 = arith.constant 0 : index
    %c0_16 = arith.constant 0 : index
    %20 = vector.load %arg8[%c0_15, %c0_16] : memref<1x128xf32, #tpu.memory_space<vmem>>, vector<1x128xf32>
    %21 = vector.broadcast %20 : vector<1x128xf32> to vector<8x128xf32>
    %22 = arith.mulf %19, %21 : vector<8x128xf32>
    %cst_17 = arith.constant dense<0.000000e+00> : vector<8xf32>
    %23 = vector.multi_reduction <add>, %22, %cst_17 [1] : vector<8x128xf32> to vector<8xf32>
    %24 = vector.shape_cast %23 : vector<8xf32> to vector<8x1xf32>
    %c0_18 = arith.constant 0 : index
    %c0_19 = arith.constant 0 : index
    %25 = vector.load %arg9[%c0_18, %c0_19] : memref<1x1xf32, #tpu.memory_space<vmem>>, vector<1x1xf32>
    %26 = vector.broadcast %25 : vector<1x1xf32> to vector<8x1xf32>
    %27 = arith.addf %24, %26 : vector<8x1xf32>
    %28 = vector.extract_strided_slice %17 {offsets = [0, 0], sizes = [8, 128], strides = [1, 1]} : vector<8x256xf32> to vector<8x128xf32>
    %c0_20 = arith.constant 0 : index
    %c0_21 = arith.constant 0 : index
    %29 = vector.load %arg10[%c0_20, %c0_21] : memref<8x128xf32, #tpu.memory_space<vmem>>, vector<8x128xf32>
    tpu.vector_store %arg10[%c0_20, %c0_21], %28 {strides = array<i32>} : memref<8x128xf32, #tpu.memory_space<vmem>>, vector<8x128xf32>,
    %c0_22 = arith.constant 0 : index
    %c4 = arith.constant 4 : index
    %30 = vector.load %arg10[%c0_22, %c4] : memref<8x128xf32, #tpu.memory_space<vmem>>, vector<8x1xf32>
    tpu.vector_store %arg10[%c0_22, %c4], %27 {strides = array<i32>} : memref<8x128xf32, #tpu.memory_space<vmem>>, vector<8x1xf32>,
    return
  }
  func.func @transform_0(%arg0: i32) -> (i32, i32) {
    %c0_i32 = arith.constant 0 : i32
    %c0_i32_0 = arith.constant 0 : i32
    return %arg0, %c0_i32 : i32, i32
  }
  func.func @transform_1(%arg0: i32) -> (i32, i32) {
    %c0_i32 = arith.constant 0 : i32
    %c0_i32_0 = arith.constant 0 : i32
    %c0_i32_1 = arith.constant 0 : i32
    return %c0_i32, %c0_i32_0 : i32, i32
  }
  func.func @transform_2(%arg0: i32) -> (i32, i32) {
    %c0_i32 = arith.constant 0 : i32
    %c0_i32_0 = arith.constant 0 : i32
    %c0_i32_1 = arith.constant 0 : i32
    return %c0_i32, %c0_i32_0 : i32, i32
  }
  func.func @transform_3(%arg0: i32) -> (i32, i32) {
    %c0_i32 = arith.constant 0 : i32
    %c0_i32_0 = arith.constant 0 : i32
    %c0_i32_1 = arith.constant 0 : i32
    return %c0_i32, %c0_i32_0 : i32, i32
  }
  func.func @transform_4(%arg0: i32) -> (i32, i32) {
    %c0_i32 = arith.constant 0 : i32
    %c0_i32_0 = arith.constant 0 : i32
    %c0_i32_1 = arith.constant 0 : i32
    return %c0_i32, %c0_i32_0 : i32, i32
  }
  func.func @transform_5(%arg0: i32) -> (i32, i32) {
    %c0_i32 = arith.constant 0 : i32
    %c0_i32_0 = arith.constant 0 : i32
    %c0_i32_1 = arith.constant 0 : i32
    return %c0_i32, %c0_i32_0 : i32, i32
  }
  func.func @transform_6(%arg0: i32) -> (i32, i32) {
    %c0_i32 = arith.constant 0 : i32
    %c0_i32_0 = arith.constant 0 : i32
    %c0_i32_1 = arith.constant 0 : i32
    return %c0_i32, %c0_i32_0 : i32, i32
  }
  func.func @transform_7(%arg0: i32) -> (i32, i32) {
    %c0_i32 = arith.constant 0 : i32
    %c0_i32_0 = arith.constant 0 : i32
    %c0_i32_1 = arith.constant 0 : i32
    return %c0_i32, %c0_i32_0 : i32, i32
  }
  func.func @transform_8(%arg0: i32) -> (i32, i32) {
    %c0_i32 = arith.constant 0 : i32
    %c0_i32_0 = arith.constant 0 : i32
    %c0_i32_1 = arith.constant 0 : i32
    return %c0_i32, %c0_i32_0 : i32, i32
  }
  func.func @transform_9(%arg0: i32) -> (i32, i32) {
    %c0_i32 = arith.constant 0 : i32
    %c0_i32_0 = arith.constant 0 : i32
    return %arg0, %c0_i32 : i32, i32
  }
}

</mosaic_0001>

<llo_original>
// kernel: actor_critic_forward.1
$region0: #{actor_critic_forward.1}
  #allocation0 [shape = 'u32[]', space=smem, size = 0x4, offset = 0x4, fixed_abs, tag = 'smem constant byte address 0x4 - core index']
  #allocation1 [shape = 'u32[72,128]{1,0:T(1,128)}', space=vmem, size = 0x9000, scoped, tag = 'internal scratch']
  #allocation2 [shape = 'f32[1,1]{1,0:T(1,128)S(1)}', space=vmem, size = 0x200, scoped, tag = 'scoped memory for actor_critic_forward.1']
  %s0 = inlined_call_operand.hbm [shape: f32[8,16], index: 0, kind: input, shape index: {}]
  %s1 = inlined_call_operand.hbm [shape: f32[16,32], index: 1, kind: input, shape index: {}]
  %s2 = inlined_call_operand.vmem [shape: f32[1,32], index: 2, kind: input, shape index: {}]
  %s3 = inlined_call_operand.hbm [shape: f32[32,32], index: 3, kind: input, shape index: {}]
  %s4 = inlined_call_operand.vmem [shape: f32[1,32], index: 4, kind: input, shape index: {}]
  %s5 = inlined_call_operand.hbm [shape: f32[32,256], index: 5, kind: input, shape index: {}]
  %s6 = inlined_call_operand.vmem [shape: f32[1,256], index: 6, kind: input, shape index: {}]
  %s7 = inlined_call_operand.hbm [shape: f32[1,128], index: 7, kind: input, shape index: {}]
  %s8 = inlined_call_operand.<no memory space> [shape: f32[1,1], index: 8, kind: input, shape index: {}]
  %s9 = inlined_call_operand.vmem [shape: f32[8,128], index: 9, kind: output, shape index: {}]
  %s10 = sld [smem:[#allocation0]]
  $region66: #{actor_critic_forward.1} parent=0
    _
  %s12 = ssub.s32 1, %s10
  %s13 = scalar_select 0, %s12, %s10
  %v14 = vstv %s8
  %15 = vst [vmem:[#allocation2] sm:$0x1] %v14
  $region1: #{actor_critic_forward.1} parent=0
    #allocation3 [shape = 'u8[4096]{0}', space=vmem, size = 0x1000, scoped, tag = 'input window, operand 0, single buffered']
    #allocation4 [shape = 's32[1]{0}', space=sflag, size = 0x4, scoped, tag = 'scoped memory for actor_critic_forward.1']
    #allocation5 [shape = 'u8[8192]{0}', space=vmem, size = 0x2000, scoped, tag = 'input window, operand 1, single buffered']
    #allocation6 [shape = 's32[1]{0}', space=sflag, size = 0x4, scoped, tag = 'scoped memory for actor_critic_forward.1']
    #allocation7 [shape = 'u8[16384]{0}', space=vmem, size = 0x4000, scoped, tag = 'input window, operand 3, single buffered']
    #allocation8 [shape = 'u8[32768]{0}', space=vmem, size = 0x8000, scoped, tag = 'input window, operand 5, single buffered']
    #allocation9 [shape = 's32[1]{0}', space=sflag, size = 0x4, scoped, tag = 'scoped memory for actor_critic_forward.1']
    #allocation10 [shape = 'u8[512]{0}', space=vmem, size = 0x400, scoped, tag = 'input window, operand 7, single buffered']
    %16 = vsyncpa [#allocation4], 0
    %17 = vsyncpa [#allocation6], 0
    %18 = vsyncpa [#allocation9], 0
    // Predicated region
    $region2: #{actor_critic_forward.1} parent=1 // pred_check
      _
    $region3: #{actor_critic_forward.1} parent=1 // pred_check_branch
      %20 = sbr.rel (0) target = $region5
    $region4: #{actor_critic_forward.1} parent=1 // pred_region
      %22 = vsyncadd [#allocation4], 0
      %s24 = sshll.u32 %s0, 4
      %s25 = int_to_ptr.hbm [resolvable:$true] %s24
      %s26 = sshll.u32 [#allocation3], 4
      %s27 = int_to_ptr.vmem [resolvable:$true] %s26
      %29 = dma.hbm_to_vmem [thread:$0]  %s25, 128, %s27, [#allocation4]
    $region5: #{actor_critic_forward.1} parent=1 // pred_fallthru
      _
    // Predicated region
    $region6: #{actor_critic_forward.1} parent=1 // pred_check
      _
    $region7: #{actor_critic_forward.1} parent=1 // pred_check_branch
      %31 = sbr.rel (0) target = $region9
    $region8: #{actor_critic_forward.1} parent=1 // pred_region
      %33 = vsyncadd [#allocation6], 0
      %s34 = sshll.u32 %s1, 4
      %s35 = int_to_ptr.hbm [resolvable:$true] %s34
      %s36 = sshll.u32 [#allocation5], 4
      %s37 = int_to_ptr.vmem [resolvable:$true] %s36
      %42 = dma.hbm_to_vmem [thread:$0]  %s35, 256, %s37, [#allocation6], 128, 128, 8
    $region9: #{actor_critic_forward.1} parent=1 // pred_fallthru
      _
    // Predicated region
    $region10: #{actor_critic_forward.1} parent=1 // pred_check
      _
    $region11: #{actor_critic_forward.1} parent=1 // pred_check_branch
      %44 = sbr.rel (0) target = $region13
    $region12: #{actor_critic_forward.1} parent=1 // pred_region
      _
    $region13: #{actor_critic_forward.1} parent=1 // pred_fallthru
      _
    // Predicated region
    $region14: #{actor_critic_forward.1} parent=1 // pred_check
      _
    $region15: #{actor_critic_forward.1} parent=1 // pred_check_branch
      %46 = sbr.rel (0) target = $region17
    $region16: #{actor_critic_forward.1} parent=1 // pred_region
      %48 = vsyncadd [#allocation6], 0
      %s49 = sshll.u32 %s3, 4
      %s50 = int_to_ptr.hbm [resolvable:$true] %s49
      %s51 = sshll.u32 [#allocation7], 4
      %s52 = int_to_ptr.vmem [resolvable:$true] %s51
      %57 = dma.hbm_to_vmem [thread:$0]  %s50, 512, %s52, [#allocation6], 128, 128, 8
    $region17: #{actor_critic_forward.1} parent=1 // pred_fallthru
      _
    // Predicated region
    $region18: #{actor_critic_forward.1} parent=1 // pred_check
      _
    $region19: #{actor_critic_forward.1} parent=1 // pred_check_branch
      %59 = sbr.rel (0) target = $region21
    $region20: #{actor_critic_forward.1} parent=1 // pred_region
      _
    $region21: #{actor_critic_forward.1} parent=1 // pred_fallthru
      _
    // Predicated region
    $region22: #{actor_critic_forward.1} parent=1 // pred_check
      _
    $region23: #{actor_critic_forward.1} parent=1 // pred_check_branch
      %61 = sbr.rel (0) target = $region25
    $region24: #{actor_critic_forward.1} parent=1 // pred_region
      %63 = vsyncadd [#allocation9], 0
      %s64 = sshll.u32 %s5, 4
      %s65 = int_to_ptr.hbm [resolvable:$true] %s64
      %s66 = sshll.u32 [#allocation8], 4
      %s67 = int_to_ptr.vmem [resolvable:$true] %s66
      %72 = dma.hbm_to_vmem [thread:$0]  %s65, 1024, %s67, [#allocation9], 256, 256, 16
    $region25: #{actor_critic_forward.1} parent=1 // pred_fallthru
      _
    // Predicated region
    $region26: #{actor_critic_forward.1} parent=1 // pred_check
      _
    $region27: #{actor_critic_forward.1} parent=1 // pred_check_branch
      %74 = sbr.rel (0) target = $region29
    $region28: #{actor_critic_forward.1} parent=1 // pred_region
      _
    $region29: #{actor_critic_forward.1} parent=1 // pred_fallthru
      _
    // Predicated region
    $region30: #{actor_critic_forward.1} parent=1 // pred_check
      _
    $region31: #{actor_critic_forward.1} parent=1 // pred_check_branch
      %76 = sbr.rel (0) target = $region33
    $region32: #{actor_critic_forward.1} parent=1 // pred_region
      %78 = vsyncadd [#allocation9], 0
      %s80 = sshll.u32 %s7, 4
      %s81 = int_to_ptr.hbm [resolvable:$true] %s80
      %s82 = sshll.u32 [#allocation10], 4
      %s83 = int_to_ptr.vmem [resolvable:$true] %s82
      %85 = dma.hbm_to_vmem [thread:$0]  %s81, 16, %s83, [#allocation9]
    $region33: #{actor_critic_forward.1} parent=1 // pred_fallthru
      _
    // Predicated region
    $region34: #{actor_critic_forward.1} parent=1 // pred_check
      _
    $region35: #{actor_critic_forward.1} parent=1 // pred_check_branch
      %87 = sbr.rel (0) target = $region37
    $region36: #{actor_critic_forward.1} parent=1 // pred_region
      _
    $region37: #{actor_critic_forward.1} parent=1 // pred_fallthru
      _
    // Predicated region
    $region38: #{actor_critic_forward.1} parent=1 // pred_check
      _
    $region39: #{actor_critic_forward.1} parent=1 // pred_check_branch
      %89 = sbr.rel (0) target = $region41
    $region40: #{actor_critic_forward.1} parent=1 // pred_region
      %91 = dma.done [#allocation4], 128
    $region41: #{actor_critic_forward.1} parent=1 // pred_fallthru
      _
    // Predicated region
    $region42: #{actor_critic_forward.1} parent=1 // pred_check
      _
    $region43: #{actor_critic_forward.1} parent=1 // pred_check_branch
      %93 = sbr.rel (0) target = $region45
    $region44: #{actor_critic_forward.1} parent=1 // pred_region
      %95 = dma.done [#allocation6], 256
    $region45: #{actor_critic_forward.1} parent=1 // pred_fallthru
      _
    // Predicated region
    $region46: #{actor_critic_forward.1} parent=1 // pred_check
      _
    $region47: #{actor_critic_forward.1} parent=1 // pred_check_branch
      %97 = sbr.rel (0) target = $region49
    $region48: #{actor_critic_forward.1} parent=1 // pred_region
      %99 = dma.done [#allocation6], 512
    $region49: #{actor_critic_forward.1} parent=1 // pred_fallthru
      _
    // Predicated region
    $region50: #{actor_critic_forward.1} parent=1 // pred_check
      _
    $region51: #{actor_critic_forward.1} parent=1 // pred_check_branch
      %101 = sbr.rel (0) target = $region53
    $region52: #{actor_critic_forward.1} parent=1 // pred_region
      %103 = dma.done [#allocation9], 1024
    $region53: #{actor_critic_forward.1} parent=1 // pred_fallthru
      _
    // Predicated region
    $region54: #{actor_critic_forward.1} parent=1 // pred_check
      _
    $region55: #{actor_critic_forward.1} parent=1 // pred_check_branch
      %105 = sbr.rel (0) target = $region57
    $region56: #{actor_critic_forward.1} parent=1 // pred_region
      %107 = dma.done [#allocation9], 16
    $region57: #{actor_critic_forward.1} parent=1 // pred_fallthru
      _
    %v108 = vld [vmem:[#allocation3] sm:$0xff]
    %v109 = vld [vmem:[#allocation5] sm:$0xff]
    %v110 = vld [vmem:[#allocation5 + $0x8] sm:$0xff]
    %v111 = vld [vmem:[%s2] sm:$0x1]
    %v113 = vperm.slane %v111, 0
    %vm115 = vcmask 130048
    %v117 = vsel %vm115, %v108, 0
    %119 = vmatpush.msra.mxu0 0.0
    %120 = vmatpush.msra.mxu0 0.0
    %121 = vmatpush.msra.mxu0 0.0
    %122 = vmatpush.msra.mxu0 0.0
    %123 = vmatpush.msra.mxu0 0.0
    %124 = vmatpush.msra.mxu0 0.0
    %125 = vmatpush.msra.mxu0 0.0
    %126 = vmatpush.msra.mxu0 0.0
    %127 = vmatpush.msra.mxu0 0.0
    %128 = vmatpush.msra.mxu0 0.0
    %129 = vmatpush.msra.mxu0 0.0
    %130 = vmatpush.msra.mxu0 0.0
    %131 = vmatpush.msra.mxu0 0.0
    %132 = vmatpush.msra.mxu0 0.0
    %133 = vmatpush.msra.mxu0 %v110
    %134 = vmatpush.msra.mxu0 %v109
    %135 = vmatmul.f32.gmra.mxu0 %v117
    %v136 = vpop.f32.mrf.mxu0
    %v137 = vadd.f32 %v113, %v136
    %138 = vdwg.mxu0
    %v139 = vtanh.pop %v137
    %v140 = vld [vmem:[#allocation7] sm:$0xff]
    %v141 = vld [vmem:[#allocation7 + $0x8] sm:$0xff]
    %v142 = vld [vmem:[#allocation7 + $0x10] sm:$0xff]
    %v143 = vld [vmem:[#allocation7 + $0x18] sm:$0xff]
    %v144 = vld [vmem:[%s4] sm:$0x1]
    %v146 = vperm.slane %v144, 0
    %vm148 = vcmask 261120
    %v150 = vsel %vm148, %v139, 0
    %152 = vmatpush.msra.mxu0 0.0
    %153 = vmatpush.msra.mxu0 0.0
    %154 = vmatpush.msra.mxu0 0.0
    %155 = vmatpush.msra.mxu0 0.0
    %156 = vmatpush.msra.mxu0 0.0
    %157 = vmatpush.msra.mxu0 0.0
    %158 = vmatpush.msra.mxu0 0.0
    %159 = vmatpush.msra.mxu0 0.0
    %160 = vmatpush.msra.mxu0 0.0
    %161 = vmatpush.msra.mxu0 0.0
    %162 = vmatpush.msra.mxu0 0.0
    %163 = vmatpush.msra.mxu0 0.0
    %164 = vmatpush.msra.mxu0 %v143
    %165 = vmatpush.msra.mxu0 %v142
    %166 = vmatpush.msra.mxu0 %v141
    %167 = vmatpush.msra.mxu0 %v140
    %168 = vmatmul.f32.gmra.mxu0 %v150
    %v169 = vpop.f32.mrf.mxu0
    %v170 = vadd.f32 %v146, %v169
    %171 = vdwg.mxu0
    %v172 = vtanh.pop %v170
    %v173 = vld [vmem:[#allocation8] sm:$0xff]
    %v174 = vld [vmem:[#allocation8 + $0x8] sm:$0xff]
    %v175 = vld [vmem:[#allocation8 + $0x10] sm:$0xff]
    %v176 = vld [vmem:[#allocation8 + $0x18] sm:$0xff]
    %v177 = vld [vmem:[#allocation8 + $0x20] sm:$0xff]
    %v178 = vld [vmem:[#allocation8 + $0x28] sm:$0xff]
    %v179 = vld [vmem:[#allocation8 + $0x30] sm:$0xff]
    %v180 = vld [vmem:[#allocation8 + $0x38] sm:$0xff]
    %v181 = vld [vmem:[%s6] sm:$0x3]
    %v183 = vperm.slane %v181, 0
    %v184 = vperm.slane %v181, 1
    %v188 = vsel %vm148, %v172, 0
    %190 = vmatpush.msra.mxu0 0.0
    %191 = vmatpush.msra.mxu0 0.0
    %192 = vmatpush.msra.mxu0 0.0
    %193 = vmatpush.msra.mxu0 0.0
    %194 = vmatpush.msra.mxu0 0.0
    %195 = vmatpush.msra.mxu0 0.0
    %196 = vmatpush.msra.mxu0 0.0
    %197 = vmatpush.msra.mxu0 0.0
    %198 = vmatpush.msra.mxu0 0.0
    %199 = vmatpush.msra.mxu0 0.0
    %200 = vmatpush.msra.mxu0 0.0
    %201 = vmatpush.msra.mxu0 0.0
    %202 = vmatpush.msra.mxu0 %v179
    %203 = vmatpush.msra.mxu0 %v177
    %204 = vmatpush.msra.mxu0 %v175
    %205 = vmatpush.msra.mxu0 %v173
    %206 = vmatmul.f32.gmra.mxu0 %v188
    %v207 = vpop.f32.mrf.mxu0
    %v208 = vadd.f32 %v183, %v207
    %209 = vdwg.mxu0
    %210 = vmatpush.msra.mxu0 0.0
    %211 = vmatpush.msra.mxu0 0.0
    %212 = vmatpush.msra.mxu0 0.0
    %213 = vmatpush.msra.mxu0 0.0
    %214 = vmatpush.msra.mxu0 0.0
    %215 = vmatpush.msra.mxu0 0.0
    %216 = vmatpush.msra.mxu0 0.0
    %217 = vmatpush.msra.mxu0 0.0
    %218 = vmatpush.msra.mxu0 0.0
    %219 = vmatpush.msra.mxu0 0.0
    %220 = vmatpush.msra.mxu0 0.0
    %221 = vmatpush.msra.mxu0 0.0
    %222 = vmatpush.msra.mxu0 %v180
    %223 = vmatpush.msra.mxu0 %v178
    %224 = vmatpush.msra.mxu0 %v176
    %225 = vmatpush.msra.mxu0 %v174
    %226 = vmatmul.f32.gmra.mxu0 %v188
    %v227 = vpop.f32.mrf.mxu0
    %v228 = vadd.f32 %v184, %v227
    %229 = vdwg.mxu0
    %v230 = vtanh.pop %v228
    %v231 = vld [vmem:[#allocation10] sm:$0x1]
    %v233 = vperm.slane %v231, 0
    %v235 = vmul.f32 %v230, %v233
    %236 = vadd.xlane.f32.xlu0 %v235
    %v237 = vpop.xlane.xlu0 %236
    %v238 = vld [vmem:[#allocation2] sm:$0x1]
    %v240 = vperm.slane %v238, 0
    %v242 = vadd.f32 %v237, %v240
    %243 = vst [vmem:[%s9] sm:$0xff] %v208
    %245 = vrot.lane.b32.xlu0 %v242, 4
    %v246 = vpop.permute.xlu0 %245
    %vm248 = vcmask 39968
    %249 = vst.msk [vmem:[%s9] sm:$0xff] %vm248, %v246
    // Predicated region
    $region58: #{actor_critic_forward.1} parent=1 // pred_check
      _
    $region59: #{actor_critic_forward.1} parent=1 // pred_check_branch
      %251 = sbr.rel (0) target = $region61
    $region60: #{actor_critic_forward.1} parent=1 // pred_region
      _
    $region61: #{actor_critic_forward.1} parent=1 // pred_fallthru
      _
    // Predicated region
    $region62: #{actor_critic_forward.1} parent=1 // pred_check
      _
    $region63: #{actor_critic_forward.1} parent=1 // pred_check_branch
      %253 = sbr.rel (0) target = $region65
    $region64: #{actor_critic_forward.1} parent=1 // pred_region
      _
    $region65: #{actor_critic_forward.1} parent=1 // pred_fallthru
      _
    %254 = vsyncpa [#allocation4], 1
    %255 = vsyncpa [#allocation6], 1
    %256 = vsyncpa [#allocation9], 1

</llo_original>
